<compile_context>
chip_gen: v7x
topology: tpu7x:2x2x1
jax: 0.10.0
libtpu: 0.0.40
codegen_flags: <defaults>
</compile_context>

<pallas_src>
import jax
import jax.numpy as jnp
from jax.experimental import pallas as pl
from jax.experimental.pallas import tpu as pltpu

LANE = 128          # TPU lane width — output head is padded to this.
MASK_VALUE = -1e30  # padded logit lanes -> exp() underflows to exactly 0


def grpo_policy_kernel(x_ref, w1_ref, b1_ref, w2_ref, b2_ref, w3_ref, b3_ref,
                       out_ref):
    """Fused MLP (Linear->ReLU->Linear->ReLU->Linear) + softmax over last dim.

    The last Linear is lane-padded to 128 outputs; padded bias lanes carry
    MASK_VALUE so their softmax probability is exactly 0.
    """
    x = x_ref[...]

    # Layer 1: Linear(state_dim -> hidden) + ReLU
    h1 = jnp.dot(x, w1_ref[...], preferred_element_type=jnp.float32) + b1_ref[...]
    h1 = jnp.maximum(h1, 0.0)

    # Layer 2: Linear(hidden -> hidden) + ReLU
    h2 = jnp.dot(h1, w2_ref[...], preferred_element_type=jnp.float32) + b2_ref[...]
    h2 = jnp.maximum(h2, 0.0)

    # Layer 3: Linear(hidden -> LANE) — real logits in [:, :action_dim],
    # padded lanes get MASK_VALUE from the padded bias.
    logits = jnp.dot(h2, w3_ref[...], preferred_element_type=jnp.float32) + b3_ref[...]

    # Numerically-stable softmax along the last axis (padded lanes -> 0).
    # Exact divide: matches the reference to float32 roundoff.
    m = jnp.max(logits, axis=-1, keepdims=True)
    e = jnp.exp(logits - m)
    s = jnp.sum(e, axis=-1, keepdims=True)
    out_ref[...] = (e / s).astype(out_ref.dtype)


def grpo_policy_forward(state, params, *, tile_m=128):
    """Calls the fused kernel with a batch-parallel grid and resident weights.

    `params` are the raw (torch-layout-transposed) parameters; the wrapper
    lane-pads the action head, pads the batch to a tile multiple, and slices
    the real (batch, action_dim) probabilities back out (layout plumbing only
    — all compute stays in the kernel).
    """
    w1, b1, w2, b2, w3, b3 = params
    batch, state_dim = state.shape
    hidden = w1.shape[1]
    action_dim = w3.shape[1]

    # --- lane-pad the output head to 128 columns ------------------------
    pad_cols = LANE - action_dim
    w3p = jnp.pad(w3, ((0, 0), (0, pad_cols)))                        # zeros
    b3p = jnp.pad(b3, ((0, 0), (0, pad_cols)),
                  constant_values=MASK_VALUE)                          # -inf-ish

    # --- pad batch to a multiple of the M tile --------------------------
    batch_pad = pl.cdiv(batch, tile_m) * tile_m
    if batch_pad != batch:
        state = jnp.pad(state, ((0, batch_pad - batch), (0, 0)))

    grid = (batch_pad // tile_m,)

    out = pl.pallas_call(
        grpo_policy_kernel,
        out_shape=jax.ShapeDtypeStruct((batch_pad, LANE), jnp.float32),
        grid=grid,
        in_specs=[
            # Activation tile streams with the grid.
            pl.BlockSpec((tile_m, state_dim), lambda i: (i, 0)),
            # Weights / biases: constant index_map -> resident in VMEM.
            pl.BlockSpec((state_dim, hidden), lambda i: (0, 0)),
            pl.BlockSpec((1, hidden), lambda i: (0, 0)),
            pl.BlockSpec((hidden, hidden), lambda i: (0, 0)),
            pl.BlockSpec((1, hidden), lambda i: (0, 0)),
            pl.BlockSpec((hidden, LANE), lambda i: (0, 0)),
            pl.BlockSpec((1, LANE), lambda i: (0, 0)),
        ],
        out_specs=pl.BlockSpec((tile_m, LANE), lambda i: (i, 0)),
        compiler_params=pltpu.CompilerParams(
            dimension_semantics=("parallel",)),
    )(state, w1, b1, w2, b2, w3p, b3p)

    # Strip batch padding and padded action lanes (prob == 0 there).
    return out[:batch, :action_dim]


def init_params(key, state_dim, action_dim, hidden_dim):
    """Deterministic synthetic init (nn.Linear-style uniform, transposed weights)."""
    k1, k2, k3, k4, k5, k6 = jax.random.split(key, 6)
    scale1 = 1.0 / jnp.sqrt(state_dim)
    scale2 = 1.0 / jnp.sqrt(hidden_dim)
    w1 = jax.random.uniform(k1, (state_dim, hidden_dim), jnp.float32, -scale1, scale1)
    b1 = jax.random.uniform(k2, (1, hidden_dim), jnp.float32, -scale1, scale1)
    w2 = jax.random.uniform(k3, (hidden_dim, hidden_dim), jnp.float32, -scale2, scale2)
    b2 = jax.random.uniform(k4, (1, hidden_dim), jnp.float32, -scale2, scale2)
    w3 = jax.random.uniform(k5, (hidden_dim, action_dim), jnp.float32, -scale2, scale2)
    b3 = jax.random.uniform(k6, (1, action_dim), jnp.float32, -scale2, scale2)
    return (w1, b1, w2, b2, w3, b3)


def reference_forward(state, params):
    """Pure-JAX reference for correctness check."""
    w1, b1, w2, b2, w3, b3 = params
    h1 = jnp.maximum(state @ w1 + b1, 0.0)
    h2 = jnp.maximum(h1 @ w2 + b2, 0.0)
    logits = h2 @ w3 + b3
    return jax.nn.softmax(logits, axis=-1)


if __name__ == "__main__":
    # Batched workload so the MXU rows are actually used (2 grid steps of 128
    # rows; on v7x the parallel grid axis shards across both TensorCores).
    batch = 256
    state_dim = 32
    hidden_dim = 256   # module default
    action_dim = 8

    key = jax.random.PRNGKey(0)
    k_state, k_params = jax.random.split(key)

    state = jax.random.normal(k_state, (batch, state_dim), dtype=jnp.float32)
    params = init_params(k_params, state_dim, action_dim, hidden_dim)

    probs = grpo_policy_forward(state, params)
    probs = jax.block_until_ready(probs)

    ref = reference_forward(state, params)
    assert probs.shape == (batch, action_dim)
    assert jnp.allclose(probs, ref, atol=2e-5, rtol=2e-5), (
        float(jnp.max(jnp.abs(probs - ref))))
    # Softmax rows must sum to 1 (padded lanes contribute exactly 0).
    assert jnp.allclose(jnp.sum(probs, axis=-1), 1.0, atol=1e-5)

    # TODO(synk): get_action() (Categorical sampling / log_prob) is host-side
    # distribution logic, not part of the forward hot path; left out of the kernel.

    print("KERNEL_OK")
</pallas_src>

<mosaic_0001>
module attributes {stable_mosaic.version = 11 : i64} {
  func.func @grpo_policy_kernel(%arg0: i32, %arg1: memref<128x32xf32, #tpu.memory_space<vmem>>, %arg2: memref<32x256xf32, #tpu.memory_space<vmem>>, %arg3: memref<1x256xf32, #tpu.memory_space<vmem>>, %arg4: memref<256x256xf32, #tpu.memory_space<vmem>>, %arg5: memref<1x256xf32, #tpu.memory_space<vmem>>, %arg6: memref<256x128xf32, #tpu.memory_space<vmem>>, %arg7: memref<1x128xf32, #tpu.memory_space<vmem>>, %arg8: memref<128x128xf32, #tpu.memory_space<vmem>>) attributes {dimension_semantics = [#tpu.dimension_semantics<parallel>], iteration_bounds = array<i64: 2>, scalar_prefetch = 0 : i64, scratch_operands = 0 : i64, tpu.core_type = #tpu.core_type<tc>, window_params = [{transform_indices = @transform_0, window_bounds = array<i64: 128, 32>}, {pipeline_mode = #tpu.pipeline_mode<synchronous>, transform_indices = @transform_1, window_bounds = array<i64: 32, 256>}, {pipeline_mode = #tpu.pipeline_mode<synchronous>, transform_indices = @transform_2, window_bounds = array<i64: 1, 256>}, {pipeline_mode = #tpu.pipeline_mode<synchronous>, transform_indices = @transform_3, window_bounds = array<i64: 256, 256>}, {pipeline_mode = #tpu.pipeline_mode<synchronous>, transform_indices = @transform_4, window_bounds = array<i64: 1, 256>}, {pipeline_mode = #tpu.pipeline_mode<synchronous>, transform_indices = @transform_5, window_bounds = array<i64: 256, 128>}, {pipeline_mode = #tpu.pipeline_mode<synchronous>, transform_indices = @transform_6, window_bounds = array<i64: 1, 128>}, {transform_indices = @transform_7, window_bounds = array<i64: 128, 128>}]} {
    %c0 = arith.constant 0 : index
    %c0_0 = arith.constant 0 : index
    %0 = vector.load %arg1[%c0, %c0_0] : memref<128x32xf32, #tpu.memory_space<vmem>>, vector<128x32xf32>
    %c0_1 = arith.constant 0 : index
    %c0_2 = arith.constant 0 : index
    %1 = vector.load %arg2[%c0_1, %c0_2] : memref<32x256xf32, #tpu.memory_space<vmem>>, vector<32x256xf32>
    %cst = arith.constant dense<0.000000e+00> : vector<128x256xf32>
    %2 = tpu.matmul %0, %1, %cst {dimension_numbers = #tpu.dot_dimension_numbers<[1], [0], [0], [1], [0, 0, 1, 1], [], []>} : vector<128x32xf32>, vector<32x256xf32>, vector<128x256xf32> -> vector<128x256xf32>
    %c0_3 = arith.constant 0 : index
    %c0_4 = arith.constant 0 : index
    %3 = vector.load %arg3[%c0_3, %c0_4] : memref<1x256xf32, #tpu.memory_space<vmem>>, vector<1x256xf32>
    %4 = vector.broadcast %3 : vector<1x256xf32> to vector<128x256xf32>
    %5 = arith.addf %2, %4 : vector<128x256xf32>
    %cst_5 = arith.constant 0.000000e+00 : f32
    %6 = vector.broadcast %cst_5 : f32 to vector<128x256xf32>
    %7 = arith.maximumf %5, %6 : vector<128x256xf32>
    %c0_6 = arith.constant 0 : index
    %c0_7 = arith.constant 0 : index
    %8 = vector.load %arg4[%c0_6, %c0_7] : memref<256x256xf32, #tpu.memory_space<vmem>>, vector<256x256xf32>
    %cst_8 = arith.constant dense<0.000000e+00> : vector<128x256xf32>
    %9 = tpu.matmul %7, %8, %cst_8 {dimension_numbers = #tpu.dot_dimension_numbers<[1], [0], [0], [1], [0, 0, 1, 1], [], []>} : vector<128x256xf32>, vector<256x256xf32>, vector<128x256xf32> -> vector<128x256xf32>
    %c0_9 = arith.constant 0 : index
    %c0_10 = arith.constant 0 : index
    %10 = vector.load %arg5[%c0_9, %c0_10] : memref<1x256xf32, #tpu.memory_space<vmem>>, vector<1x256xf32>
    %11 = vector.broadcast %10 : vector<1x256xf32> to vector<128x256xf32>
    %12 = arith.addf %9, %11 : vector<128x256xf32>
    %cst_11 = arith.constant 0.000000e+00 : f32
    %13 = vector.broadcast %cst_11 : f32 to vector<128x256xf32>
    %14 = arith.maximumf %12, %13 : vector<128x256xf32>
    %c0_12 = arith.constant 0 : index
    %c0_13 = arith.constant 0 : index
    %15 = vector.load %arg6[%c0_12, %c0_13] : memref<256x128xf32, #tpu.memory_space<vmem>>, vector<256x128xf32>
    %cst_14 = arith.constant dense<0.000000e+00> : vector<128x128xf32>
    %16 = tpu.matmul %14, %15, %cst_14 {dimension_numbers = #tpu.dot_dimension_numbers<[1], [0], [0], [1], [0, 0, 1, 1], [], []>} : vector<128x256xf32>, vector<256x128xf32>, vector<128x128xf32> -> vector<128x128xf32>
    %c0_15 = arith.constant 0 : index
    %c0_16 = arith.constant 0 : index
    %17 = vector.load %arg7[%c0_15, %c0_16] : memref<1x128xf32, #tpu.memory_space<vmem>>, vector<1x128xf32>
    %18 = vector.broadcast %17 : vector<1x128xf32> to vector<128x128xf32>
    %19 = arith.addf %16, %18 : vector<128x128xf32>
    %cst_17 = arith.constant dense<0xFF800000> : vector<128xf32>
    %20 = vector.multi_reduction <maximumf>, %19, %cst_17 [1] : vector<128x128xf32> to vector<128xf32>
    %21 = vector.shape_cast %20 : vector<128xf32> to vector<128x1xf32>
    %22 = vector.broadcast %21 : vector<128x1xf32> to vector<128x128xf32>
    %23 = arith.subf %19, %22 : vector<128x128xf32>
    %24 = math.exp %23 : vector<128x128xf32>
    %cst_18 = arith.constant dense<0.000000e+00> : vector<128xf32>
    %25 = vector.multi_reduction <add>, %24, %cst_18 [1] : vector<128x128xf32> to vector<128xf32>
    %26 = vector.shape_cast %25 : vector<128xf32> to vector<128x1xf32>
    %27 = vector.broadcast %26 : vector<128x1xf32> to vector<128x128xf32>
    %28 = arith.divf %24, %27 : vector<128x128xf32>
    %c0_19 = arith.constant 0 : index
    %c0_20 = arith.constant 0 : index
    %29 = vector.load %arg8[%c0_19, %c0_20] : memref<128x128xf32, #tpu.memory_space<vmem>>, vector<128x128xf32>
    tpu.vector_store %arg8[%c0_19, %c0_20], %28 {strides = array<i32>} : memref<128x128xf32, #tpu.memory_space<vmem>>, vector<128x128xf32>,
    return
  }
  func.func @transform_0(%arg0: i32) -> (i32, i32) {
    %c0_i32 = arith.constant 0 : i32
    %c0_i32_0 = arith.constant 0 : i32
    return %arg0, %c0_i32 : i32, i32
  }
  func.func @transform_1(%arg0: i32) -> (i32, i32) {
    %c0_i32 = arith.constant 0 : i32
    %c0_i32_0 = arith.constant 0 : i32
    %c0_i32_1 = arith.constant 0 : i32
    return %c0_i32, %c0_i32_0 : i32, i32
  }
  func.func @transform_2(%arg0: i32) -> (i32, i32) {
    %c0_i32 = arith.constant 0 : i32
    %c0_i32_0 = arith.constant 0 : i32
    %c0_i32_1 = arith.constant 0 : i32
    return %c0_i32, %c0_i32_0 : i32, i32
  }
  func.func @transform_3(%arg0: i32) -> (i32, i32) {
    %c0_i32 = arith.constant 0 : i32
    %c0_i32_0 = arith.constant 0 : i32
    %c0_i32_1 = arith.constant 0 : i32
    return %c0_i32, %c0_i32_0 : i32, i32
  }
  func.func @transform_4(%arg0: i32) -> (i32, i32) {
    %c0_i32 = arith.constant 0 : i32
    %c0_i32_0 = arith.constant 0 : i32
    %c0_i32_1 = arith.constant 0 : i32
    return %c0_i32, %c0_i32_0 : i32, i32
  }
  func.func @transform_5(%arg0: i32) -> (i32, i32) {
    %c0_i32 = arith.constant 0 : i32
    %c0_i32_0 = arith.constant 0 : i32
    %c0_i32_1 = arith.constant 0 : i32
    return %c0_i32, %c0_i32_0 : i32, i32
  }
  func.func @transform_6(%arg0: i32) -> (i32, i32) {
    %c0_i32 = arith.constant 0 : i32
    %c0_i32_0 = arith.constant 0 : i32
    %c0_i32_1 = arith.constant 0 : i32
    return %c0_i32, %c0_i32_0 : i32, i32
  }
  func.func @transform_7(%arg0: i32) -> (i32, i32) {
    %c0_i32 = arith.constant 0 : i32
    %c0_i32_0 = arith.constant 0 : i32
    return %arg0, %c0_i32 : i32, i32
  }
}

</mosaic_0001>

<llo_original>
// kernel: tpu_custom_call.1
$region0: #{tpu_custom_call.1}
  #allocation0 [shape = 'u32[]', space=smem, size = 0x4, offset = 0x4, fixed_abs, tag = 'smem constant byte address 0x4 - core index']
  #allocation1 [shape = 'u32[144,128]{1,0:T(1,128)}', space=vmem, size = 0x12000, scoped, tag = 'internal scratch']
  %s0 = inlined_call_operand.vmem [shape: f32[256,32], index: 0, kind: input, shape index: {}]
  %s1 = inlined_call_operand.vmem [shape: f32[32,256], index: 1, kind: input, shape index: {}]
  %s2 = inlined_call_operand.vmem [shape: f32[1,256], index: 2, kind: input, shape index: {}]
  %s3 = inlined_call_operand.hbm [shape: f32[256,256], index: 3, kind: input, shape index: {}]
  %s4 = inlined_call_operand.vmem [shape: f32[1,256], index: 4, kind: input, shape index: {}]
  %s5 = inlined_call_operand.vmem [shape: f32[256,128], index: 5, kind: input, shape index: {}]
  %s6 = inlined_call_operand.vmem [shape: f32[1,128], index: 6, kind: input, shape index: {}]
  %s7 = inlined_call_operand.hbm [shape: f32[256,128], index: 7, kind: output, shape index: {}]
  %s8 = sld [smem:[#allocation0]]
  $region65: #{tpu_custom_call.1} parent=0
    _
  %s10 = ssub.s32 1, %s8
  %s11 = scalar_select 0, %s10, %s8
  $region1: #{tpu_custom_call.1} parent=0
    #allocation2 [shape = 'u8[262144]{0}', space=vmem, size = 0x40000, scoped, tag = 'input window, operand 3, single buffered']
    #allocation3 [shape = 's32[2]{0}', space=sflag, size = 0x8, scoped, tag = 'scoped memory for tpu_custom_call.1']
    #allocation4 [shape = 's32[2]{0}', space=sflag, size = 0x8, scoped, tag = 'scoped memory for tpu_custom_call.1']
    #allocation5 [shape = 'u8[131072]{0}', space=vmem, size = 0x20000, scoped, tag = 'output window, operand 0']
    %12 = vsyncpa [#allocation3], 0
    %13 = vsyncpa [#allocation4], 0
    %s14 = scalar_lea.sflag [#allocation4], 1
    %15 = vsyncpa %s14, 0
    loop: start=0, step=1, limit=4
    $region2: #{tpu_custom_call.1} parent=1 // loop_pre_header
      _
    $region3: #{tpu_custom_call.1} parent=1 // loop_header
      %s17 = sphi 0, %s21
      %p18 = scmp.ge.s32.totalorder %s17, 4
      %s27 = sphi 0, %s29
      %s30 = sphi 0, %s27
      %s31 = sphi 0, %s30
      %s47 = sphi 0, %s31
      %s51 = sphi 0, %s51
      %s53 = sphi 0, %s51
      %s54 = sphi 0, %s53
      %s68 = sphi 0, %s54
      %s72 = sphi 0, %s72
      %s74 = sphi 0, %s72
      %s75 = sphi 0, %s74
      %s89 = sphi 0, %s75
      %s93 = sphi 0, %s93
      %s95 = sphi 0, %s93
      %s96 = sphi 0, %s95
      %s110 = sphi 0, %s96
      %s114 = sphi 0, %s114
      %s116 = sphi 0, %s114
      %s117 = sphi 0, %s116
      %s131 = sphi 0, %s117
      %s135 = sphi 0, %s135
      %s137 = sphi 0, %s135
      %s138 = sphi 0, %s137
      %s152 = sphi 0, %s138
      %s156 = sphi 0, %s156
      %s158 = sphi 0, %s156
      %s159 = sphi 0, %s158
      %s173 = sphi 0, %s159
      %s179 = sphi 0, %s181
      %s182 = sphi 0, %s179
      %s183 = sphi 0, %s182
      %s199 = sphi 0, %s183
    $region4: #{tpu_custom_call.1} parent=1 // loop_header_branch
      %20 = sbr.rel (%p18) target = $region8
    $region5: #{tpu_custom_call.1} parent=1 // loop_body
      %s22 = ssub.s32 %s17, 1
      %s23 = ssub.s32 %s17, 2
      %s24 = sadd.s32 %s17, 1
      %s25 = ssub.s32 %s17, %s24
      %p26 = scmp.eq.s32.totalorder %s25, 0
      %s28 = sadd.s32 %s27, 1
      %s29 = scalar_select %p26, %s27, %s28
      %p32 = pneg %p26
      %p33 = scmp.eq.s32.totalorder %s17, 1
      %p34 = por %p32, %p33
      %p35 = scmp.ne.s32.totalorder %s27, %s30
      %p36 = scmp.eq.s32.totalorder %s17, 0
      %p37 = por %p35, %p36
      %p38 = scmp.ne.s32.totalorder %s27, %s30
      %p39 = scmp.eq.s32.totalorder %s22, 1
      %p40 = por %p38, %p39
      %p41 = scmp.ne.s32.totalorder %s30, %s31
      %p42 = scmp.eq.s32.totalorder %s22, 0
      %p43 = por %p41, %p42
      %p44 = scmp.ne.s32.totalorder %s30, %s31
      %p45 = scmp.eq.s32.totalorder %s23, 1
      %p46 = por %p44, %p45
      %p48 = scmp.ne.s32.totalorder %s31, %s47
      %p49 = scmp.eq.s32.totalorder %s23, 0
      %p50 = por %p48, %p49
      %s52 = sadd.s32 %s51, 1
      %p55 = scmp.eq.s32.totalorder %s17, 1
      %p56 = scmp.ne.s32.totalorder %s51, %s53
      %p57 = scmp.eq.s32.totalorder %s17, 0
      %p58 = por %p56, %p57
      %p59 = scmp.ne.s32.totalorder %s51, %s53
      %p60 = scmp.eq.s32.totalorder %s22, 1
      %p61 = por %p59, %p60
      %p62 = scmp.ne.s32.totalorder %s53, %s54
      %p63 = scmp.eq.s32.totalorder %s22, 0
      %p64 = por %p62, %p63
      %p65 = scmp.ne.s32.totalorder %s53, %s54
      %p66 = scmp.eq.s32.totalorder %s23, 1
      %p67 = por %p65, %p66
      %p69 = scmp.ne.s32.totalorder %s54, %s68
      %p70 = scmp.eq.s32.totalorder %s23, 0
      %p71 = por %p69, %p70
      %s73 = sadd.s32 %s72, 1
      %p76 = scmp.eq.s32.totalorder %s17, 1
      %p77 = scmp.ne.s32.totalorder %s72, %s74
      %p78 = scmp.eq.s32.totalorder %s17, 0
      %p79 = por %p77, %p78
      %p80 = scmp.ne.s32.totalorder %s72, %s74
      %p81 = scmp.eq.s32.totalorder %s22, 1
      %p82 = por %p80, %p81
      %p83 = scmp.ne.s32.totalorder %s74, %s75
      %p84 = scmp.eq.s32.totalorder %s22, 0
      %p85 = por %p83, %p84
      %p86 = scmp.ne.s32.totalorder %s74, %s75
      %p87 = scmp.eq.s32.totalorder %s23, 1
      %p88 = por %p86, %p87
      %p90 = scmp.ne.s32.totalorder %s75, %s89
      %p91 = scmp.eq.s32.totalorder %s23, 0
      %p92 = por %p90, %p91
      %s94 = sadd.s32 %s93, 1
      %p97 = scmp.eq.s32.totalorder %s17, 1
      %p98 = scmp.ne.s32.totalorder %s93, %s95
      %p99 = scmp.eq.s32.totalorder %s17, 0
      %p100 = por %p98, %p99
      %p101 = scmp.ne.s32.totalorder %s93, %s95
      %p102 = scmp.eq.s32.totalorder %s22, 1
      %p103 = por %p101, %p102
      %p104 = scmp.ne.s32.totalorder %s95, %s96
      %p105 = scmp.eq.s32.totalorder %s22, 0
      %p106 = por %p104, %p105
      %p107 = scmp.ne.s32.totalorder %s95, %s96
      %p108 = scmp.eq.s32.totalorder %s23, 1
      %p109 = por %p107, %p108
      %p111 = scmp.ne.s32.totalorder %s96, %s110
      %p112 = scmp.eq.s32.totalorder %s23, 0
      %p113 = por %p111, %p112
      %s115 = sadd.s32 %s114, 1
      %p118 = scmp.eq.s32.totalorder %s17, 1
      %p119 = scmp.ne.s32.totalorder %s114, %s116
      %p120 = scmp.eq.s32.totalorder %s17, 0
      %p121 = por %p119, %p120
      %p122 = scmp.ne.s32.totalorder %s114, %s116
      %p123 = scmp.eq.s32.totalorder %s22, 1
      %p124 = por %p122, %p123
      %p125 = scmp.ne.s32.totalorder %s116, %s117
      %p126 = scmp.eq.s32.totalorder %s22, 0
      %p127 = por %p125, %p126
      %p128 = scmp.ne.s32.totalorder %s116, %s117
      %p129 = scmp.eq.s32.totalorder %s23, 1
      %p130 = por %p128, %p129
      %p132 = scmp.ne.s32.totalorder %s117, %s131
      %p133 = scmp.eq.s32.totalorder %s23, 0
      %p134 = por %p132, %p133
      %s136 = sadd.s32 %s135, 1
      %p139 = scmp.eq.s32.totalorder %s17, 1
      %p140 = scmp.ne.s32.totalorder %s135, %s137
      %p141 = scmp.eq.s32.totalorder %s17, 0
      %p142 = por %p140, %p141
      %p143 = scmp.ne.s32.totalorder %s135, %s137
      %p144 = scmp.eq.s32.totalorder %s22, 1
      %p145 = por %p143, %p144
      %p146 = scmp.ne.s32.totalorder %s137, %s138
      %p147 = scmp.eq.s32.totalorder %s22, 0
      %p148 = por %p146, %p147
      %p149 = scmp.ne.s32.totalorder %s137, %s138
      %p150 = scmp.eq.s32.totalorder %s23, 1
      %p151 = por %p149, %p150
      %p153 = scmp.ne.s32.totalorder %s138, %s152
      %p154 = scmp.eq.s32.totalorder %s23, 0
      %p155 = por %p153, %p154
      %s157 = sadd.s32 %s156, 1
      %p160 = scmp.eq.s32.totalorder %s17, 1
      %p161 = scmp.ne.s32.totalorder %s156, %s158
      %p162 = scmp.eq.s32.totalorder %s17, 0
      %p163 = por %p161, %p162
      %p164 = scmp.ne.s32.totalorder %s156, %s158
      %p165 = scmp.eq.s32.totalorder %s22, 1
      %p166 = por %p164, %p165
      %p167 = scmp.ne.s32.totalorder %s158, %s159
      %p168 = scmp.eq.s32.totalorder %s22, 0
      %p169 = por %p167, %p168
      %p170 = scmp.ne.s32.totalorder %s158, %s159
      %p171 = scmp.eq.s32.totalorder %s23, 1
      %p172 = por %p170, %p171
      %p174 = scmp.ne.s32.totalorder %s159, %s173
      %p175 = scmp.eq.s32.totalorder %s23, 0
      %p176 = por %p174, %p175
      %s177 = ssub.s32 %s17, %s24
      %p178 = scmp.eq.s32.totalorder %s177, 0
      %s180 = sadd.s32 %s179, 1
      %s181 = scalar_select %p178, %s179, %s180
      %p184 = pneg %p178
      %p185 = scmp.eq.s32.totalorder %s17, 1
      %p186 = por %p184, %p185
      %p187 = scmp.ne.s32.totalorder %s179, %s182
      %p188 = scmp.eq.s32.totalorder %s17, 0
      %p189 = por %p187, %p188
      %p190 = scmp.ne.s32.totalorder %s179, %s182
      %p191 = scmp.eq.s32.totalorder %s22, 1
      %p192 = por %p190, %p191
      %p193 = scmp.ne.s32.totalorder %s182, %s183
      %p194 = scmp.eq.s32.totalorder %s22, 0
      %p195 = por %p193, %p194
      %p196 = scmp.ne.s32.totalorder %s182, %s183
      %p197 = scmp.eq.s32.totalorder %s23, 1
      %p198 = por %p196, %p197
      %p200 = scmp.ne.s32.totalorder %s183, %s199
      %p201 = scmp.eq.s32.totalorder %s23, 0
      %p202 = por %p200, %p201
      %p203 = scmp.le.s32.totalorder 1, %s17
      %p204 = scmp.lt.s32.totalorder %s17, 3
      %p205 = pnand %p203, %p204
      %p206 = pneg %p205
      // Predicated region
      $region9: #{tpu_custom_call.1} parent=5 // pred_check
        _
      $region10: #{tpu_custom_call.1} parent=5 // pred_check_branch
        %208 = sbr.rel (%p205) target = $region12
      $region11: #{tpu_custom_call.1} parent=5 // pred_region
        %s209 = ssub.s32 %s17, 1
        // Predicated region
        $region13: #{tpu_custom_call.1} parent=11 // pred_check
          %p210 = pneg %p64
        $region14: #{tpu_custom_call.1} parent=11 // pred_check_branch
          %212 = sbr.rel (%p210) target = $region16
        $region15: #{tpu_custom_call.1} parent=11 // pred_region
          _
        $region16: #{tpu_custom_call.1} parent=11 // pred_fallthru
          _
        // Predicated region
        $region17: #{tpu_custom_call.1} parent=11 // pred_check
          %p213 = pneg %p85
        $region18: #{tpu_custom_call.1} parent=11 // pred_check_branch
          %215 = sbr.rel (%p213) target = $region20
        $region19: #{tpu_custom_call.1} parent=11 // pred_region
          _
        $region20: #{tpu_custom_call.1} parent=11 // pred_fallthru
          _
        // Predicated region
        $region21: #{tpu_custom_call.1} parent=11 // pred_check
          %p216 = pneg %p106
        $region22: #{tpu_custom_call.1} parent=11 // pred_check_branch
          %218 = sbr.rel (%p216) target = $region24
        $region23: #{tpu_custom_call.1} parent=11 // pred_region
          %s220 = ssub.s32 8192, 8192
          %221 = vsyncadd [#allocation3], %s220
          %s222 = sshll.u32 [#allocation2], 4
          %s223 = int_to_ptr.vmem [resolvable:$true] %s222
          %228 = dma.hbm_to_vmem [thread:$0]  %s3, 8192, %s223, [#allocation3], 256, 256, 16
        $region24: #{tpu_custom_call.1} parent=11 // pred_fallthru
          _
        // Predicated region
        $region25: #{tpu_custom_call.1} parent=11 // pred_check
          %p229 = pneg %p127
        $region26: #{tpu_custom_call.1} parent=11 // pred_check_branch
          %231 = sbr.rel (%p229) target = $region28
        $region27: #{tpu_custom_call.1} parent=11 // pred_region
          _
        $region28: #{tpu_custom_call.1} parent=11 // pred_fallthru
          _
        // Predicated region
        $region29: #{tpu_custom_call.1} parent=11 // pred_check
          %p232 = pneg %p148
        $region30: #{tpu_custom_call.1} parent=11 // pred_check_branch
          %234 = sbr.rel (%p232) target = $region32
        $region31: #{tpu_custom_call.1} parent=11 // pred_region
          _
        $region32: #{tpu_custom_call.1} parent=11 // pred_fallthru
          _
        // Predicated region
        $region33: #{tpu_custom_call.1} parent=11 // pred_check
          %p235 = pneg %p169
        $region34: #{tpu_custom_call.1} parent=11 // pred_check_branch
          %237 = sbr.rel (%p235) target = $region36
        $region35: #{tpu_custom_call.1} parent=11 // pred_region
          _
        $region36: #{tpu_custom_call.1} parent=11 // pred_fallthru
          _
      $region12: #{tpu_custom_call.1} parent=5 // pred_fallthru
        _
      %p238 = scmp.lt.s32.totalorder %s17, 2
      // Predicated region
      $region37: #{tpu_custom_call.1} parent=5 // pred_check
        %p239 = pneg %p238
      $region38: #{tpu_custom_call.1} parent=5 // pred_check_branch
        %241 = sbr.rel (%p239) target = $region40
      $region39: #{tpu_custom_call.1} parent=5 // pred_region
        // Predicated region
        $region41: #{tpu_custom_call.1} parent=39 // pred_check
          %p242 = pneg %p37
        $region42: #{tpu_custom_call.1} parent=39 // pred_check_branch
          %244 = sbr.rel (%p242) target = $region44
        $region43: #{tpu_custom_call.1} parent=39 // pred_region
          %s245 = smul.u32 16, %s17
          %p246 = scmp.lt.s32.totalorder %s245, 31
          %s247 = scalar_select %p246, %s245, 31
          %s248 = smul.addr %s247, 8
          %s249 = scalar_lea.vmem %s0, %s248
          %s250 = smul.u32 16, %s17
        $region44: #{tpu_custom_call.1} parent=39 // pred_fallthru
          _
      $region40: #{tpu_custom_call.1} parent=5 // pred_fallthru
        _
      %p251 = scmp.le.s32.totalorder 1, %s17
      %p252 = scmp.lt.s32.totalorder %s17, 3
      %p253 = pnand %p251, %p252
      %p254 = pneg %p253
      // Predicated region
      $region45: #{tpu_custom_call.1} parent=5 // pred_check
        _
      $region46: #{tpu_custom_call.1} parent=5 // pred_check_branch
        %256 = sbr.rel (%p253) target = $region48
      $region47: #{tpu_custom_call.1} parent=5 // pred_region
        %s257 = ssub.s32 %s17, 1
        // Predicated region
        $region49: #{tpu_custom_call.1} parent=47 // pred_check
          %p258 = pneg %p106
        $region50: #{tpu_custom_call.1} parent=47 // pred_check_branch
          %260 = sbr.rel (%p258) target = $region52
        $region51: #{tpu_custom_call.1} parent=47 // pred_region
          %261 = dma.done [#allocation3], 8192
        $region52: #{tpu_custom_call.1} parent=47 // pred_fallthru
          _
        %s262 = smul.u32 16, %s22
        %p263 = scmp.lt.s32.totalorder %s262, 31
        %s264 = scalar_select %p263, %s262, 31
        %s265 = smul.addr %s264, 8
        %s266 = scalar_lea.vmem %s0, %s265
        %p267 = pneg %p43
        %p268 = pneg %p40
        %p269 = pneg %p64
        %p270 = pneg %p61
        %p271 = pneg %p85
        %p272 = pneg %p82
        %p273 = pneg %p106
        %p274 = pneg %p103
        %p275 = pneg %p127
        %p276 = pneg %p124
        %p277 = pneg %p148
        %p278 = pneg %p145
        %p279 = pneg %p169
        %p280 = pneg %p166
        %p281 = pneg %p195
        %p282 = pneg %p192
        %s283 = sand.u32 %s182, 1
        %s284 = scalar_lea.sflag [#allocation4], %s283
        %s285 = sand.u32 %s182, 1
        %s286 = smul.addr %s285, 128
        %s287 = scalar_lea.vmem [#allocation5], %s286
        %s288 = smul.u32 16, %s22
        %p289 = scmp.lt.s32.totalorder %s288, 31
        %s290 = scalar_select %p289, %s288, 31
        %s291 = smul.addr %s290, 8
        %s292 = scalar_lea.vmem %s0, %s291
        %s293 = smul.u32 16, %s22
        %s294 = smul.u32 16, %s22
        %v295 = vld [vmem:[%s292] sm:$0xff]
        %v296 = vld [vmem:[%s292 + $0x8] sm:$0xff]
        %v297 = vld [vmem:[%s292 + $0x10] sm:$0xff]
        %v298 = vld [vmem:[%s292 + $0x18] sm:$0xff]
        %v299 = vld [vmem:[%s292 + $0x20] sm:$0xff]
        %v300 = vld [vmem:[%s292 + $0x28] sm:$0xff]
        %v301 = vld [vmem:[%s292 + $0x30] sm:$0xff]
        %v302 = vld [vmem:[%s292 + $0x38] sm:$0xff]
        %v303 = vld [vmem:[%s292 + $0x40] sm:$0xff]
        %v304 = vld [vmem:[%s292 + $0x48] sm:$0xff]
        %v305 = vld [vmem:[%s292 + $0x50] sm:$0xff]
        %v306 = vld [vmem:[%s292 + $0x58] sm:$0xff]
        %v307 = vld [vmem:[%s292 + $0x60] sm:$0xff]
        %v308 = vld [vmem:[%s292 + $0x68] sm:$0xff]
        %v309 = vld [vmem:[%s292 + $0x70] sm:$0xff]
        %v310 = vld [vmem:[%s292 + $0x78] sm:$0xff]
        %v311 = vld [vmem:[%s1] sm:$0xff]
        %v312 = vld [vmem:[%s1 + $0x8] sm:$0xff]
        %v313 = vld [vmem:[%s1 + $0x10] sm:$0xff]
        %v314 = vld [vmem:[%s1 + $0x18] sm:$0xff]
        %v315 = vld [vmem:[%s1 + $0x20] sm:$0xff]
        %v316 = vld [vmem:[%s1 + $0x28] sm:$0xff]
        %v317 = vld [vmem:[%s1 + $0x30] sm:$0xff]
        %v318 = vld [vmem:[%s1 + $0x38] sm:$0xff]
        %v319 = vld [vmem:[%s2] sm:$0x3]
        %v321 = vlaneseq
        %v322 = vshrl.u32 %v321, 7
        %v323 = vsub.s32 0, %v322
        %v324 = vrot.slane %v319, %v323
        %v325 = vlaneseq
        %v326 = vshrl.u32 %v325, 7
        %v327 = vsub.s32 1, %v326
        %v328 = vrot.slane %v319, %v327
        %vm331 = vcmask 261120
        %v333 = vsel %vm331, %v295, 0
        %v336 = vsel %vm331, %v296, 0
        %v339 = vsel %vm331, %v297, 0
        %v342 = vsel %vm331, %v298, 0
        %v345 = vsel %vm331, %v299, 0
        %v348 = vsel %vm331, %v300, 0
        %v351 = vsel %vm331, %v301, 0
        %v354 = vsel %vm331, %v302, 0
        %v357 = vsel %vm331, %v303, 0
        %v360 = vsel %vm331, %v304, 0
        %v363 = vsel %vm331, %v305, 0
        %v366 = vsel %vm331, %v306, 0
        %v369 = vsel %vm331, %v307, 0
        %v372 = vsel %vm331, %v308, 0
        %v375 = vsel %vm331, %v309, 0
        %v378 = vsel %vm331, %v310, 0
        %380 = vmatprep.subr.mxu0 %v312
        %381 = vmatpush1.msra.mxu0 %v311
        %382 = vmatprep.subr.mxu0 %v314
        %383 = vmatpush1.msra.mxu0 %v313
        %384 = vmatprep.subr.mxu0 %v316
        %385 = vmatpush1.msra.mxu0 %v315
        %386 = vmatprep.subr.mxu0 %v318
        %387 = vmatpush1.msra.mxu0 %v317
        %388 = vmatprep.subr.mxu0 0.0
        %389 = vmatpush1.msra.mxu0 0.0
        %390 = vmatprep.subr.mxu0 0.0
        %391 = vmatpush1.msra.mxu0 0.0
        %392 = vmatprep.subr.mxu0 0.0
        %393 = vmatpush1.msra.mxu0 0.0
        %394 = vmatprep.subr.mxu0 0.0
        %395 = vmatpush1.msra.mxu0 0.0
        %396 = vmatprep.subr.mxu0 0.0
        %397 = vmatpush1.msra.mxu0 0.0
        %398 = vmatprep.subr.mxu0 0.0
        %399 = vmatpush1.msra.mxu0 0.0
        %400 = vmatprep.subr.mxu0 0.0
        %401 = vmatpush1.msra.mxu0 0.0
        %402 = vmatprep.subr.mxu0 0.0
        %403 = vmatpush1.msra.mxu0 0.0
        %404 = vmatprep.subr.mxu0 0.0
        %405 = vmatpush1.msra.mxu0 0.0
        %406 = vmatprep.subr.mxu0 0.0
        %407 = vmatpush1.msra.mxu0 0.0
        %408 = vmatprep.subr.mxu0 0.0
        %409 = vmatpush1.msra.mxu0 0.0
        %410 = vmatprep.subr.mxu0 0.0
        %411 = vmatpush1.msra.mxu0 0.0
        %412 = vmatprep.subr.mxu0 0.0
        %413 = vmatpush1.msra.mxu0 0.0
        %414 = vmatprep.subr.mxu0 0.0
        %415 = vmatpush1.msra.mxu0 0.0
        %416 = vmatprep.subr.mxu0 0.0
        %417 = vmatpush1.msra.mxu0 0.0
        %418 = vmatprep.subr.mxu0 0.0
        %419 = vmatpush1.msra.mxu0 0.0
        %420 = vmatprep.subr.mxu0 0.0
        %421 = vmatpush1.msra.mxu0 0.0
        %422 = vmatprep.subr.mxu0 0.0
        %423 = vmatpush1.msra.mxu0 0.0
        %424 = vmatprep.subr.mxu0 0.0
        %425 = vmatpush1.msra.mxu0 0.0
        %426 = vmatprep.subr.mxu0 0.0
        %427 = vmatpush1.msra.mxu0 0.0
        %428 = vmatprep.subr.mxu0 0.0
        %429 = vmatpush1.msra.mxu0 0.0
        %430 = vmatprep.subr.mxu0 0.0
        %431 = vmatpush1.msra.mxu0 0.0
        %432 = vmatprep.subr.mxu0 0.0
        %433 = vmatpush1.msra.mxu0 0.0
        %434 = vmatprep.subr.mxu0 0.0
        %435 = vmatpush1.msra.mxu0 0.0
        %436 = vmatprep.subr.mxu0 0.0
        %437 = vmatpush1.msra.mxu0 0.0
        %438 = vmatprep.subr.mxu0 0.0
        %439 = vmatpush1.msra.mxu0 0.0
        %440 = vmatprep.subr.mxu0 0.0
        %441 = vmatpush1.msra.mxu0 0.0
        %442 = vmatprep.subr.mxu0 0.0
        %443 = vmatpush1.msra.mxu0 0.0
        %444 = vmatprep.mubr.f32.mxu0 0.0
        %445 = vmatmul.mubr.f32.gmra.mrb[0].mxu0 %v333
        %v446 = vpop.f32.mrb[0].mxu0
        %v447 = vadd.f32 %v324, %v446
        %v448 = vpop.f32.mrb[0].mxu0
        %v449 = vadd.f32 %v328, %v448
        %450 = vmatprep.mubr.f32.mxu0 0.0
        %451 = vmatmul.mubr.f32.gmra.mrb[0].mxu0 %v336
        %v452 = vpop.f32.mrb[0].mxu0
        %v453 = vadd.f32 %v324, %v452
        %v454 = vpop.f32.mrb[0].mxu0
        %v455 = vadd.f32 %v328, %v454
        %456 = vmatprep.mubr.f32.mxu0 0.0
        %457 = vmatmul.mubr.f32.gmra.mrb[0].mxu0 %v339
        %v458 = vpop.f32.mrb[0].mxu0
        %v459 = vadd.f32 %v324, %v458
        %v460 = vpop.f32.mrb[0].mxu0
        %v461 = vadd.f32 %v328, %v460
        %462 = vmatprep.mubr.f32.mxu0 0.0
        %463 = vmatmul.mubr.f32.gmra.mrb[0].mxu0 %v342
        %v464 = vpop.f32.mrb[0].mxu0
        %v465 = vadd.f32 %v324, %v464
        %v466 = vpop.f32.mrb[0].mxu0
        %v467 = vadd.f32 %v328, %v466
        %468 = vmatprep.mubr.f32.mxu0 0.0
        %469 = vmatmul.mubr.f32.gmra.mrb[0].mxu0 %v345
        %v470 = vpop.f32.mrb[0].mxu0
        %v471 = vadd.f32 %v324, %v470
        %v472 = vpop.f32.mrb[0].mxu0
        %v473 = vadd.f32 %v328, %v472
        %474 = vmatprep.mubr.f32.mxu0 0.0
        %475 = vmatmul.mubr.f32.gmra.mrb[0].mxu0 %v348
        %v476 = vpop.f32.mrb[0].mxu0
        %v477 = vadd.f32 %v324, %v476
        %v478 = vpop.f32.mrb[0].mxu0
        %v479 = vadd.f32 %v328, %v478
        %480 = vmatprep.mubr.f32.mxu0 0.0
        %481 = vmatmul.mubr.f32.gmra.mrb[0].mxu0 %v351
        %v482 = vpop.f32.mrb[0].mxu0
        %v483 = vadd.f32 %v324, %v482
        %v484 = vpop.f32.mrb[0].mxu0
        %v485 = vadd.f32 %v328, %v484
        %486 = vmatprep.mubr.f32.mxu0 0.0
        %487 = vmatmul.mubr.f32.gmra.mrb[0].mxu0 %v354
        %v488 = vpop.f32.mrb[0].mxu0
        %v489 = vadd.f32 %v324, %v488
        %v490 = vpop.f32.mrb[0].mxu0
        %v491 = vadd.f32 %v328, %v490
        %492 = vmatprep.mubr.f32.mxu0 0.0
        %493 = vmatmul.mubr.f32.gmra.mrb[0].mxu0 %v357
        %v494 = vpop.f32.mrb[0].mxu0
        %v495 = vadd.f32 %v324, %v494
        %v496 = vpop.f32.mrb[0].mxu0
        %v497 = vadd.f32 %v328, %v496
        %498 = vmatprep.mubr.f32.mxu0 0.0
        %499 = vmatmul.mubr.f32.gmra.mrb[0].mxu0 %v360
        %v500 = vpop.f32.mrb[0].mxu0
        %v501 = vadd.f32 %v324, %v500
        %v502 = vpop.f32.mrb[0].mxu0
        %v503 = vadd.f32 %v328, %v502
        %504 = vmatprep.mubr.f32.mxu0 0.0
        %505 = vmatmul.mubr.f32.gmra.mrb[0].mxu0 %v363
        %v506 = vpop.f32.mrb[0].mxu0
        %v507 = vadd.f32 %v324, %v506
        %v508 = vpop.f32.mrb[0].mxu0
        %v509 = vadd.f32 %v328, %v508
        %510 = vmatprep.mubr.f32.mxu0 0.0
        %511 = vmatmul.mubr.f32.gmra.mrb[0].mxu0 %v366
        %v512 = vpop.f32.mrb[0].mxu0
        %v513 = vadd.f32 %v324, %v512
        %v514 = vpop.f32.mrb[0].mxu0
        %v515 = vadd.f32 %v328, %v514
        %516 = vmatprep.mubr.f32.mxu0 0.0
        %517 = vmatmul.mubr.f32.gmra.mrb[0].mxu0 %v369
        %v518 = vpop.f32.mrb[0].mxu0
        %v519 = vadd.f32 %v324, %v518
        %v520 = vpop.f32.mrb[0].mxu0
        %v521 = vadd.f32 %v328, %v520
        %522 = vmatprep.mubr.f32.mxu0 0.0
        %523 = vmatmul.mubr.f32.gmra.mrb[0].mxu0 %v372
        %v524 = vpop.f32.mrb[0].mxu0
        %v525 = vadd.f32 %v324, %v524
        %v526 = vpop.f32.mrb[0].mxu0
        %v527 = vadd.f32 %v328, %v526
        %528 = vmatprep.mubr.f32.mxu0 0.0
        %529 = vmatmul.mubr.f32.gmra.mrb[0].mxu0 %v375
        %v530 = vpop.f32.mrb[0].mxu0
        %v531 = vadd.f32 %v324, %v530
        %v532 = vpop.f32.mrb[0].mxu0
        %v533 = vadd.f32 %v328, %v532
        %534 = vmatprep.mubr.f32.mxu0 0.0
        %535 = vmatmul.mubr.f32.gmra.mrb[0].mxu0 %v378
        %v536 = vpop.f32.mrb[0].mxu0
        %v537 = vadd.f32 %v324, %v536
        %v538 = vpop.f32.mrb[0].mxu0
        %v539 = vadd.f32 %v328, %v538
        %540 = vdwg.mxu0
        %v541 = vmax.f32 %v447, 0.0
        %v542 = vmax.f32 %v449, 0.0
        %v543 = vmax.f32 %v453, 0.0
        %v544 = vmax.f32 %v455, 0.0
        %v545 = vmax.f32 %v459, 0.0
        %v546 = vmax.f32 %v461, 0.0
        %v547 = vmax.f32 %v465, 0.0
        %v548 = vmax.f32 %v467, 0.0
        %v549 = vmax.f32 %v471, 0.0
        %v550 = vmax.f32 %v473, 0.0
        %v551 = vmax.f32 %v477, 0.0
        %v552 = vmax.f32 %v479, 0.0
        %v553 = vmax.f32 %v483, 0.0
        %v554 = vmax.f32 %v485, 0.0
        %v555 = vmax.f32 %v489, 0.0
        %v556 = vmax.f32 %v491, 0.0
        %v557 = vmax.f32 %v495, 0.0
        %v558 = vmax.f32 %v497, 0.0
        %v559 = vmax.f32 %v501, 0.0
        %v560 = vmax.f32 %v503, 0.0
        %v561 = vmax.f32 %v507, 0.0
        %v562 = vmax.f32 %v509, 0.0
        %v563 = vmax.f32 %v513, 0.0
        %v564 = vmax.f32 %v515, 0.0
        %v565 = vmax.f32 %v519, 0.0
        %v566 = vmax.f32 %v521, 0.0
        %v567 = vmax.f32 %v525, 0.0
        %v568 = vmax.f32 %v527, 0.0
        %v569 = vmax.f32 %v531, 0.0
        %v570 = vmax.f32 %v533, 0.0
        %v571 = vmax.f32 %v537, 0.0
        %v572 = vmax.f32 %v539, 0.0
        %v573 = vld [vmem:[#allocation2] sm:$0xff]
        %v574 = vld [vmem:[#allocation2 + $0x8] sm:$0xff]
        %v575 = vld [vmem:[#allocation2 + $0x10] sm:$0xff]
        %v576 = vld [vmem:[#allocation2 + $0x18] sm:$0xff]
        %v577 = vld [vmem:[#allocation2 + $0x20] sm:$0xff]
        %v578 = vld [vmem:[#allocation2 + $0x28] sm:$0xff]
        %v579 = vld [vmem:[#allocation2 + $0x30] sm:$0xff]
        %v580 = vld [vmem:[#allocation2 + $0x38] sm:$0xff]
        %v581 = vld [vmem:[#allocation2 + $0x40] sm:$0xff]
        %v582 = vld [vmem:[#allocation2 + $0x48] sm:$0xff]
        %v583 = vld [vmem:[#allocation2 + $0x50] sm:$0xff]
        %v584 = vld [vmem:[#allocation2 + $0x58] sm:$0xff]
        %v585 = vld [vmem:[#allocation2 + $0x60] sm:$0xff]
        %v586 = vld [vmem:[#allocation2 + $0x68] sm:$0xff]
        %v587 = vld [vmem:[#allocation2 + $0x70] sm:$0xff]
        %v588 = vld [vmem:[#allocation2 + $0x78] sm:$0xff]
        %v589 = vld [vmem:[#allocation2 + $0x80] sm:$0xff]
        %v590 = vld [vmem:[#allocation2 + $0x88] sm:$0xff]
        %v591 = vld [vmem:[#allocation2 + $0x90] sm:$0xff]
        %v592 = vld [vmem:[#allocation2 + $0x98] sm:$0xff]
        %v593 = vld [vmem:[#allocation2 + $0xa0] sm:$0xff]
        %v594 = vld [vmem:[#allocation2 + $0xa8] sm:$0xff]
        %v595 = vld [vmem:[#allocation2 + $0xb0] sm:$0xff]
        %v596 = vld [vmem:[#allocation2 + $0xb8] sm:$0xff]
        %v597 = vld [vmem:[#allocation2 + $0xc0] sm:$0xff]
        %v598 = vld [vmem:[#allocation2 + $0xc8] sm:$0xff]
        %v599 = vld [vmem:[#allocation2 + $0xd0] sm:$0xff]
        %v600 = vld [vmem:[#allocation2 + $0xd8] sm:$0xff]
        %v601 = vld [vmem:[#allocation2 + $0xe0] sm:$0xff]
        %v602 = vld [vmem:[#allocation2 + $0xe8] sm:$0xff]
        %v603 = vld [vmem:[#allocation2 + $0xf0] sm:$0xff]
        %v604 = vld [vmem:[#allocation2 + $0xf8] sm:$0xff]
        %v605 = vld [vmem:[#allocation2 + $0x100] sm:$0xff]
        %v606 = vld [vmem:[#allocation2 + $0x108] sm:$0xff]
        %v607 = vld [vmem:[#allocation2 + $0x110] sm:$0xff]
        %v608 = vld [vmem:[#allocation2 + $0x118] sm:$0xff]
        %v609 = vld [vmem:[#allocation2 + $0x120] sm:$0xff]
        %v610 = vld [vmem:[#allocation2 + $0x128] sm:$0xff]
        %v611 = vld [vmem:[#allocation2 + $0x130] sm:$0xff]
        %v612 = vld [vmem:[#allocation2 + $0x138] sm:$0xff]
        %v613 = vld [vmem:[#allocation2 + $0x140] sm:$0xff]
        %v614 = vld [vmem:[#allocation2 + $0x148] sm:$0xff]
        %v615 = vld [vmem:[#allocation2 + $0x150] sm:$0xff]
        %v616 = vld [vmem:[#allocation2 + $0x158] sm:$0xff]
        %v617 = vld [vmem:[#allocation2 + $0x160] sm:$0xff]
        %v618 = vld [vmem:[#allocation2 + $0x168] sm:$0xff]
        %v619 = vld [vmem:[#allocation2 + $0x170] sm:$0xff]
        %v620 = vld [vmem:[#allocation2 + $0x178] sm:$0xff]
        %v621 = vld [vmem:[#allocation2 + $0x180] sm:$0xff]
        %v622 = vld [vmem:[#allocation2 + $0x188] sm:$0xff]
        %v623 = vld [vmem:[#allocation2 + $0x190] sm:$0xff]
        %v624 = vld [vmem:[#allocation2 + $0x198] sm:$0xff]
        %v625 = vld [vmem:[#allocation2 + $0x1a0] sm:$0xff]
        %v626 = vld [vmem:[#allocation2 + $0x1a8] sm:$0xff]
        %v627 = vld [vmem:[#allocation2 + $0x1b0] sm:$0xff]
        %v628 = vld [vmem:[#allocation2 + $0x1b8] sm:$0xff]
        %v629 = vld [vmem:[#allocation2 + $0x1c0] sm:$0xff]
        %v630 = vld [vmem:[#allocation2 + $0x1c8] sm:$0xff]
        %v631 = vld [vmem:[#allocation2 + $0x1d0] sm:$0xff]
        %v632 = vld [vmem:[#allocation2 + $0x1d8] sm:$0xff]
        %v633 = vld [vmem:[#allocation2 + $0x1e0] sm:$0xff]
        %v634 = vld [vmem:[#allocation2 + $0x1e8] sm:$0xff]
        %v635 = vld [vmem:[#allocation2 + $0x1f0] sm:$0xff]
        %v636 = vld [vmem:[#allocation2 + $0x1f8] sm:$0xff]
        %v637 = vld [vmem:[%s4] sm:$0x3]
        %v639 = vlaneseq
        %v640 = vshrl.u32 %v639, 7
        %v641 = vsub.s32 0, %v640
        %v642 = vrot.slane %v637, %v641
        %v643 = vlaneseq
        %v644 = vshrl.u32 %v643, 7
        %v645 = vsub.s32 1, %v644
        %v646 = vrot.slane %v637, %v645
        %649 = vmatprep.subr.mxu0 %v574
        %650 = vmatpush1.msra.mxu0 %v573
        %651 = vmatprep.subr.mxu0 %v576
        %652 = vmatpush1.msra.mxu0 %v575
        %653 = vmatprep.subr.mxu0 %v578
        %654 = vmatpush1.msra.mxu0 %v577
        %655 = vmatprep.subr.mxu0 %v580
        %656 = vmatpush1.msra.mxu0 %v579
        %657 = vmatprep.subr.mxu0 %v582
        %658 = vmatpush1.msra.mxu0 %v581
        %659 = vmatprep.subr.mxu0 %v584
        %660 = vmatpush1.msra.mxu0 %v583
        %661 = vmatprep.subr.mxu0 %v586
        %662 = vmatpush1.msra.mxu0 %v585
        %663 = vmatprep.subr.mxu0 %v588
        %664 = vmatpush1.msra.mxu0 %v587
        %665 = vmatprep.subr.mxu0 %v590
        %666 = vmatpush1.msra.mxu0 %v589
        %667 = vmatprep.subr.mxu0 %v592
        %668 = vmatpush1.msra.mxu0 %v591
        %669 = vmatprep.subr.mxu0 %v594
        %670 = vmatpush1.msra.mxu0 %v593
        %671 = vmatprep.subr.mxu0 %v596
        %672 = vmatpush1.msra.mxu0 %v595
        %673 = vmatprep.subr.mxu0 %v598
        %674 = vmatpush1.msra.mxu0 %v597
        %675 = vmatprep.subr.mxu0 %v600
        %676 = vmatpush1.msra.mxu0 %v599
        %677 = vmatprep.subr.mxu0 %v602
        %678 = vmatpush1.msra.mxu0 %v601
        %679 = vmatprep.subr.mxu0 %v604
        %680 = vmatpush1.msra.mxu0 %v603
        %681 = vmatprep.subr.mxu0 %v606
        %682 = vmatpush1.msra.mxu0 %v605
        %683 = vmatprep.subr.mxu0 %v608
        %684 = vmatpush1.msra.mxu0 %v607
        %685 = vmatprep.subr.mxu0 %v610
        %686 = vmatpush1.msra.mxu0 %v609
        %687 = vmatprep.subr.mxu0 %v612
        %688 = vmatpush1.msra.mxu0 %v611
        %689 = vmatprep.subr.mxu0 %v614
        %690 = vmatpush1.msra.mxu0 %v613
        %691 = vmatprep.subr.mxu0 %v616
        %692 = vmatpush1.msra.mxu0 %v615
        %693 = vmatprep.subr.mxu0 %v618
        %694 = vmatpush1.msra.mxu0 %v617
        %695 = vmatprep.subr.mxu0 %v620
        %696 = vmatpush1.msra.mxu0 %v619
        %697 = vmatprep.subr.mxu0 %v622
        %698 = vmatpush1.msra.mxu0 %v621
        %699 = vmatprep.subr.mxu0 %v624
        %700 = vmatpush1.msra.mxu0 %v623
        %701 = vmatprep.subr.mxu0 %v626
        %702 = vmatpush1.msra.mxu0 %v625
        %703 = vmatprep.subr.mxu0 %v628
        %704 = vmatpush1.msra.mxu0 %v627
        %705 = vmatprep.subr.mxu0 %v630
        %706 = vmatpush1.msra.mxu0 %v629
        %707 = vmatprep.subr.mxu0 %v632
        %708 = vmatpush1.msra.mxu0 %v631
        %709 = vmatprep.subr.mxu0 %v634
        %710 = vmatpush1.msra.mxu0 %v633
        %711 = vmatprep.subr.mxu0 %v636
        %712 = vmatpush1.msra.mxu0 %v635
        %713 = vmatprep.mubr.f32.mxu0 %v542
        %714 = vmatmul.mubr.f32.gmra.mrb[0].mxu0 %v541
        %v715 = vpop.f32.mrb[0].mxu0
        %v716 = vadd.f32 %v642, %v715
        %v717 = vpop.f32.mrb[0].mxu0
        %v718 = vadd.f32 %v646, %v717
        %719 = vmatprep.mubr.f32.mxu0 %v544
        %720 = vmatmul.mubr.f32.gmra.mrb[0].mxu0 %v543
        %v721 = vpop.f32.mrb[0].mxu0
        %v722 = vadd.f32 %v642, %v721
        %v723 = vpop.f32.mrb[0].mxu0
        %v724 = vadd.f32 %v646, %v723
        %725 = vmatprep.mubr.f32.mxu0 %v546
        %726 = vmatmul.mubr.f32.gmra.mrb[0].mxu0 %v545
        %v727 = vpop.f32.mrb[0].mxu0
        %v728 = vadd.f32 %v642, %v727
        %v729 = vpop.f32.mrb[0].mxu0
        %v730 = vadd.f32 %v646, %v729
        %731 = vmatprep.mubr.f32.mxu0 %v548
        %732 = vmatmul.mubr.f32.gmra.mrb[0].mxu0 %v547
        %v733 = vpop.f32.mrb[0].mxu0
        %v734 = vadd.f32 %v642, %v733
        %v735 = vpop.f32.mrb[0].mxu0
        %v736 = vadd.f32 %v646, %v735
        %737 = vmatprep.mubr.f32.mxu0 %v550
        %738 = vmatmul.mubr.f32.gmra.mrb[0].mxu0 %v549
        %v739 = vpop.f32.mrb[0].mxu0
        %v740 = vadd.f32 %v642, %v739
        %v741 = vpop.f32.mrb[0].mxu0
        %v742 = vadd.f32 %v646, %v741
        %743 = vmatprep.mubr.f32.mxu0 %v552
        %744 = vmatmul.mubr.f32.gmra.mrb[0].mxu0 %v551
        %v745 = vpop.f32.mrb[0].mxu0
        %v746 = vadd.f32 %v642, %v745
        %v747 = vpop.f32.mrb[0].mxu0
        %v748 = vadd.f32 %v646, %v747
        %749 = vmatprep.mubr.f32.mxu0 %v554
        %750 = vmatmul.mubr.f32.gmra.mrb[0].mxu0 %v553
        %v751 = vpop.f32.mrb[0].mxu0
        %v752 = vadd.f32 %v642, %v751
        %v753 = vpop.f32.mrb[0].mxu0
        %v754 = vadd.f32 %v646, %v753
        %755 = vmatprep.mubr.f32.mxu0 %v556
        %756 = vmatmul.mubr.f32.gmra.mrb[0].mxu0 %v555
        %v757 = vpop.f32.mrb[0].mxu0
        %v758 = vadd.f32 %v642, %v757
        %v759 = vpop.f32.mrb[0].mxu0
        %v760 = vadd.f32 %v646, %v759
        %761 = vmatprep.mubr.f32.mxu0 %v558
        %762 = vmatmul.mubr.f32.gmra.mrb[0].mxu0 %v557
        %v763 = vpop.f32.mrb[0].mxu0
        %v764 = vadd.f32 %v642, %v763
        %v765 = vpop.f32.mrb[0].mxu0
        %v766 = vadd.f32 %v646, %v765
        %767 = vmatprep.mubr.f32.mxu0 %v560
        %768 = vmatmul.mubr.f32.gmra.mrb[0].mxu0 %v559
        %v769 = vpop.f32.mrb[0].mxu0
        %v770 = vadd.f32 %v642, %v769
        %v771 = vpop.f32.mrb[0].mxu0
        %v772 = vadd.f32 %v646, %v771
        %773 = vmatprep.mubr.f32.mxu0 %v562
        %774 = vmatmul.mubr.f32.gmra.mrb[0].mxu0 %v561
        %v775 = vpop.f32.mrb[0].mxu0
        %v776 = vadd.f32 %v642, %v775
        %v777 = vpop.f32.mrb[0].mxu0
        %v778 = vadd.f32 %v646, %v777
        %779 = vmatprep.mubr.f32.mxu0 %v564
        %780 = vmatmul.mubr.f32.gmra.mrb[0].mxu0 %v563
        %v781 = vpop.f32.mrb[0].mxu0
        %v782 = vadd.f32 %v642, %v781
        %v783 = vpop.f32.mrb[0].mxu0
        %v784 = vadd.f32 %v646, %v783
        %785 = vmatprep.mubr.f32.mxu0 %v566
        %786 = vmatmul.mubr.f32.gmra.mrb[0].mxu0 %v565
        %v787 = vpop.f32.mrb[0].mxu0
        %v788 = vadd.f32 %v642, %v787
        %v789 = vpop.f32.mrb[0].mxu0
        %v790 = vadd.f32 %v646, %v789
        %791 = vmatprep.mubr.f32.mxu0 %v568
        %792 = vmatmul.mubr.f32.gmra.mrb[0].mxu0 %v567
        %v793 = vpop.f32.mrb[0].mxu0
        %v794 = vadd.f32 %v642, %v793
        %v795 = vpop.f32.mrb[0].mxu0
        %v796 = vadd.f32 %v646, %v795
        %797 = vmatprep.mubr.f32.mxu0 %v570
        %798 = vmatmul.mubr.f32.gmra.mrb[0].mxu0 %v569
        %v799 = vpop.f32.mrb[0].mxu0
        %v800 = vadd.f32 %v642, %v799
        %v801 = vpop.f32.mrb[0].mxu0
        %v802 = vadd.f32 %v646, %v801
        %803 = vmatprep.mubr.f32.mxu0 %v572
        %804 = vmatmul.mubr.f32.gmra.mrb[0].mxu0 %v571
        %v805 = vpop.f32.mrb[0].mxu0
        %v806 = vadd.f32 %v642, %v805
        %v807 = vpop.f32.mrb[0].mxu0
        %v808 = vadd.f32 %v646, %v807
        %809 = vdwg.mxu0
        %v810 = vmax.f32 %v716, 0.0
        %v811 = vmax.f32 %v718, 0.0
        %v812 = vmax.f32 %v722, 0.0
        %v813 = vmax.f32 %v724, 0.0
        %v814 = vmax.f32 %v728, 0.0
        %v815 = vmax.f32 %v730, 0.0
        %v816 = vmax.f32 %v734, 0.0
        %v817 = vmax.f32 %v736, 0.0
        %v818 = vmax.f32 %v740, 0.0
        %v819 = vmax.f32 %v742, 0.0
        %v820 = vmax.f32 %v746, 0.0
        %v821 = vmax.f32 %v748, 0.0
        %v822 = vmax.f32 %v752, 0.0
        %v823 = vmax.f32 %v754, 0.0
        %v824 = vmax.f32 %v758, 0.0
        %v825 = vmax.f32 %v760, 0.0
        %v826 = vmax.f32 %v764, 0.0
        %v827 = vmax.f32 %v766, 0.0
        %v828 = vmax.f32 %v770, 0.0
        %v829 = vmax.f32 %v772, 0.0
        %v830 = vmax.f32 %v776, 0.0
        %v831 = vmax.f32 %v778, 0.0
        %v832 = vmax.f32 %v782, 0.0
        %v833 = vmax.f32 %v784, 0.0
        %v834 = vmax.f32 %v788, 0.0
        %v835 = vmax.f32 %v790, 0.0
        %v836 = vmax.f32 %v794, 0.0
        %v837 = vmax.f32 %v796, 0.0
        %v838 = vmax.f32 %v800, 0.0
        %v839 = vmax.f32 %v802, 0.0
        %v840 = vmax.f32 %v806, 0.0
        %v841 = vmax.f32 %v808, 0.0
        %v842 = vld [vmem:[%s5] sm:$0xff]
        %v843 = vld [vmem:[%s5 + $0x8] sm:$0xff]
        %v844 = vld [vmem:[%s5 + $0x10] sm:$0xff]
        %v845 = vld [vmem:[%s5 + $0x18] sm:$0xff]
        %v846 = vld [vmem:[%s5 + $0x20] sm:$0xff]
        %v847 = vld [vmem:[%s5 + $0x28] sm:$0xff]
        %v848 = vld [vmem:[%s5 + $0x30] sm:$0xff]
        %v849 = vld [vmem:[%s5 + $0x38] sm:$0xff]
        %v850 = vld [vmem:[%s5 + $0x40] sm:$0xff]
        %v851 = vld [vmem:[%s5 + $0x48] sm:$0xff]
        %v852 = vld [vmem:[%s5 + $0x50] sm:$0xff]
        %v853 = vld [vmem:[%s5 + $0x58] sm:$0xff]
        %v854 = vld [vmem:[%s5 + $0x60] sm:$0xff]
        %v855 = vld [vmem:[%s5 + $0x68] sm:$0xff]
        %v856 = vld [vmem:[%s5 + $0x70] sm:$0xff]
        %v857 = vld [vmem:[%s5 + $0x78] sm:$0xff]
        %v858 = vld [vmem:[%s5 + $0x80] sm:$0xff]
        %v859 = vld [vmem:[%s5 + $0x88] sm:$0xff]
        %v860 = vld [vmem:[%s5 + $0x90] sm:$0xff]
        %v861 = vld [vmem:[%s5 + $0x98] sm:$0xff]
        %v862 = vld [vmem:[%s5 + $0xa0] sm:$0xff]
        %v863 = vld [vmem:[%s5 + $0xa8] sm:$0xff]
        %v864 = vld [vmem:[%s5 + $0xb0] sm:$0xff]
        %v865 = vld [vmem:[%s5 + $0xb8] sm:$0xff]
        %v866 = vld [vmem:[%s5 + $0xc0] sm:$0xff]
        %v867 = vld [vmem:[%s5 + $0xc8] sm:$0xff]
        %v868 = vld [vmem:[%s5 + $0xd0] sm:$0xff]
        %v869 = vld [vmem:[%s5 + $0xd8] sm:$0xff]
        %v870 = vld [vmem:[%s5 + $0xe0] sm:$0xff]
        %v871 = vld [vmem:[%s5 + $0xe8] sm:$0xff]
        %v872 = vld [vmem:[%s5 + $0xf0] sm:$0xff]
        %v873 = vld [vmem:[%s5 + $0xf8] sm:$0xff]
        %v874 = vld [vmem:[%s6] sm:$0x1]
        %v876 = vlaneseq
        %v877 = vshrl.u32 %v876, 7
        %v878 = vsub.s32 0, %v877
        %v879 = vrot.slane %v874, %v878
        %881 = vmatprep.subr.mxu0 0.0
        %882 = vmatpush1.msra.mxu0 %v842
        %883 = vmatprep.subr.mxu0 0.0
        %884 = vmatpush1.msra.mxu0 %v843
        %885 = vmatprep.subr.mxu0 0.0
        %886 = vmatpush1.msra.mxu0 %v844
        %887 = vmatprep.subr.mxu0 0.0
        %888 = vmatpush1.msra.mxu0 %v845
        %889 = vmatprep.subr.mxu0 0.0
        %890 = vmatpush1.msra.mxu0 %v846
        %891 = vmatprep.subr.mxu0 0.0
        %892 = vmatpush1.msra.mxu0 %v847
        %893 = vmatprep.subr.mxu0 0.0
        %894 = vmatpush1.msra.mxu0 %v848
        %895 = vmatprep.subr.mxu0 0.0
        %896 = vmatpush1.msra.mxu0 %v849
        %897 = vmatprep.subr.mxu0 0.0
        %898 = vmatpush1.msra.mxu0 %v850
        %899 = vmatprep.subr.mxu0 0.0
        %900 = vmatpush1.msra.mxu0 %v851
        %901 = vmatprep.subr.mxu0 0.0
        %902 = vmatpush1.msra.mxu0 %v852
        %903 = vmatprep.subr.mxu0 0.0
        %904 = vmatpush1.msra.mxu0 %v853
        %905 = vmatprep.subr.mxu0 0.0
        %906 = vmatpush1.msra.mxu0 %v854
        %907 = vmatprep.subr.mxu0 0.0
        %908 = vmatpush1.msra.mxu0 %v855
        %909 = vmatprep.subr.mxu0 0.0
        %910 = vmatpush1.msra.mxu0 %v856
        %911 = vmatprep.subr.mxu0 0.0
        %912 = vmatpush1.msra.mxu0 %v857
        %913 = vmatprep.subr.mxu0 0.0
        %914 = vmatpush1.msra.mxu0 %v858
        %915 = vmatprep.subr.mxu0 0.0
        %916 = vmatpush1.msra.mxu0 %v859
        %917 = vmatprep.subr.mxu0 0.0
        %918 = vmatpush1.msra.mxu0 %v860
        %919 = vmatprep.subr.mxu0 0.0
        %920 = vmatpush1.msra.mxu0 %v861
        %921 = vmatprep.subr.mxu0 0.0
        %922 = vmatpush1.msra.mxu0 %v862
        %923 = vmatprep.subr.mxu0 0.0
        %924 = vmatpush1.msra.mxu0 %v863
        %925 = vmatprep.subr.mxu0 0.0
        %926 = vmatpush1.msra.mxu0 %v864
        %927 = vmatprep.subr.mxu0 0.0
        %928 = vmatpush1.msra.mxu0 %v865
        %929 = vmatprep.subr.mxu0 0.0
        %930 = vmatpush1.msra.mxu0 %v866
        %931 = vmatprep.subr.mxu0 0.0
        %932 = vmatpush1.msra.mxu0 %v867
        %933 = vmatprep.subr.mxu0 0.0
        %934 = vmatpush1.msra.mxu0 %v868
        %935 = vmatprep.subr.mxu0 0.0
        %936 = vmatpush1.msra.mxu0 %v869
        %937 = vmatprep.subr.mxu0 0.0
        %938 = vmatpush1.msra.mxu0 %v870
        %939 = vmatprep.subr.mxu0 0.0
        %940 = vmatpush1.msra.mxu0 %v871
        %941 = vmatprep.subr.mxu0 0.0
        %942 = vmatpush1.msra.mxu0 %v872
        %943 = vmatprep.subr.mxu0 0.0
        %944 = vmatpush1.msra.mxu0 %v873
        %945 = vmatprep.mubr.f32.mxu0 %v811
        %946 = vmatmul.mubr.f32.gmra.mrb[0].mxu0 %v810
        %v947 = vpop.f32.mrb[0].mxu0
        %v948 = vadd.f32 %v879, %v947
        %v949 = vpop.f32.mrb[0].mxu0
        %950 = vmatprep.mubr.f32.mxu0 %v813
        %951 = vmatmul.mubr.f32.gmra.mrb[0].mxu0 %v812
        %v952 = vpop.f32.mrb[0].mxu0
        %v953 = vadd.f32 %v879, %v952
        %v954 = vpop.f32.mrb[0].mxu0
        %955 = vmatprep.mubr.f32.mxu0 %v815
        %956 = vmatmul.mubr.f32.gmra.mrb[0].mxu0 %v814
        %v957 = vpop.f32.mrb[0].mxu0
        %v958 = vadd.f32 %v879, %v957
        %v959 = vpop.f32.mrb[0].mxu0
        %960 = vmatprep.mubr.f32.mxu0 %v817
        %961 = vmatmul.mubr.f32.gmra.mrb[0].mxu0 %v816
        %v962 = vpop.f32.mrb[0].mxu0
        %v963 = vadd.f32 %v879, %v962
        %v964 = vpop.f32.mrb[0].mxu0
        %965 = vmatprep.mubr.f32.mxu0 %v819
        %966 = vmatmul.mubr.f32.gmra.mrb[0].mxu0 %v818
        %v967 = vpop.f32.mrb[0].mxu0
        %v968 = vadd.f32 %v879, %v967
        %v969 = vpop.f32.mrb[0].mxu0
        %970 = vmatprep.mubr.f32.mxu0 %v821
        %971 = vmatmul.mubr.f32.gmra.mrb[0].mxu0 %v820
        %v972 = vpop.f32.mrb[0].mxu0
        %v973 = vadd.f32 %v879, %v972
        %v974 = vpop.f32.mrb[0].mxu0
        %975 = vmatprep.mubr.f32.mxu0 %v823
        %976 = vmatmul.mubr.f32.gmra.mrb[0].mxu0 %v822
        %v977 = vpop.f32.mrb[0].mxu0
        %v978 = vadd.f32 %v879, %v977
        %v979 = vpop.f32.mrb[0].mxu0
        %980 = vmatprep.mubr.f32.mxu0 %v825
        %981 = vmatmul.mubr.f32.gmra.mrb[0].mxu0 %v824
        %v982 = vpop.f32.mrb[0].mxu0
        %v983 = vadd.f32 %v879, %v982
        %v984 = vpop.f32.mrb[0].mxu0
        %985 = vmatprep.mubr.f32.mxu0 %v827
        %986 = vmatmul.mubr.f32.gmra.mrb[0].mxu0 %v826
        %v987 = vpop.f32.mrb[0].mxu0
        %v988 = vadd.f32 %v879, %v987
        %v989 = vpop.f32.mrb[0].mxu0
        %990 = vmatprep.mubr.f32.mxu0 %v829
        %991 = vmatmul.mubr.f32.gmra.mrb[0].mxu0 %v828
        %v992 = vpop.f32.mrb[0].mxu0
        %v993 = vadd.f32 %v879, %v992
        %v994 = vpop.f32.mrb[0].mxu0
        %995 = vmatprep.mubr.f32.mxu0 %v831
        %996 = vmatmul.mubr.f32.gmra.mrb[0].mxu0 %v830
        %v997 = vpop.f32.mrb[0].mxu0
        %v998 = vadd.f32 %v879, %v997
        %v999 = vpop.f32.mrb[0].mxu0
        %1000 = vmatprep.mubr.f32.mxu0 %v833
        %1001 = vmatmul.mubr.f32.gmra.mrb[0].mxu0 %v832
        %v1002 = vpop.f32.mrb[0].mxu0
        %v1003 = vadd.f32 %v879, %v1002
        %v1004 = vpop.f32.mrb[0].mxu0
        %1005 = vmatprep.mubr.f32.mxu0 %v835
        %1006 = vmatmul.mubr.f32.gmra.mrb[0].mxu0 %v834
        %v1007 = vpop.f32.mrb[0].mxu0
        %v1008 = vadd.f32 %v879, %v1007
        %v1009 = vpop.f32.mrb[0].mxu0
        %1010 = vmatprep.mubr.f32.mxu0 %v837
        %1011 = vmatmul.mubr.f32.gmra.mrb[0].mxu0 %v836
        %v1012 = vpop.f32.mrb[0].mxu0
        %v1013 = vadd.f32 %v879, %v1012
        %v1014 = vpop.f32.mrb[0].mxu0
        %1015 = vmatprep.mubr.f32.mxu0 %v839
        %1016 = vmatmul.mubr.f32.gmra.mrb[0].mxu0 %v838
        %v1017 = vpop.f32.mrb[0].mxu0
        %v1018 = vadd.f32 %v879, %v1017
        %v1019 = vpop.f32.mrb[0].mxu0
        %1020 = vmatprep.mubr.f32.mxu0 %v841
        %1021 = vmatmul.mubr.f32.gmra.mrb[0].mxu0 %v840
        %v1022 = vpop.f32.mrb[0].mxu0
        %v1023 = vadd.f32 %v879, %v1022
        %v1024 = vpop.f32.mrb[0].mxu0
        %1025 = vdwg.mxu0
        %1026 = vmax.xlane.f32.xlu0 %v948
        %v1027 = vpop.xlane.xlu0 %1026
        %1028 = vmax.xlane.f32.xlu0 %v953
        %v1029 = vpop.xlane.xlu0 %1028
        %1030 = vmax.xlane.f32.xlu0 %v958
        %v1031 = vpop.xlane.xlu0 %1030
        %1032 = vmax.xlane.f32.xlu0 %v963
        %v1033 = vpop.xlane.xlu0 %1032
        %1034 = vmax.xlane.f32.xlu0 %v968
        %v1035 = vpop.xlane.xlu0 %1034
        %1036 = vmax.xlane.f32.xlu0 %v973
        %v1037 = vpop.xlane.xlu0 %1036
        %1038 = vmax.xlane.f32.xlu0 %v978
        %v1039 = vpop.xlane.xlu0 %1038
        %1040 = vmax.xlane.f32.xlu0 %v983
        %v1041 = vpop.xlane.xlu0 %1040
        %1042 = vmax.xlane.f32.xlu0 %v988
        %v1043 = vpop.xlane.xlu0 %1042
        %1044 = vmax.xlane.f32.xlu0 %v993
        %v1045 = vpop.xlane.xlu0 %1044
        %1046 = vmax.xlane.f32.xlu0 %v998
        %v1047 = vpop.xlane.xlu0 %1046
        %1048 = vmax.xlane.f32.xlu0 %v1003
        %v1049 = vpop.xlane.xlu0 %1048
        %1050 = vmax.xlane.f32.xlu0 %v1008
        %v1051 = vpop.xlane.xlu0 %1050
        %1052 = vmax.xlane.f32.xlu0 %v1013
        %v1053 = vpop.xlane.xlu0 %1052
        %1054 = vmax.xlane.f32.xlu0 %v1018
        %v1055 = vpop.xlane.xlu0 %1054
        %1056 = vmax.xlane.f32.xlu0 %v1023
        %v1057 = vpop.xlane.xlu0 %1056
        %v1058 = vsub.f32 %v948, %v1027
        %v1059 = vsub.f32 %v953, %v1029
        %v1060 = vsub.f32 %v958, %v1031
        %v1061 = vsub.f32 %v963, %v1033
        %v1062 = vsub.f32 %v968, %v1035
        %v1063 = vsub.f32 %v973, %v1037
        %v1064 = vsub.f32 %v978, %v1039
        %v1065 = vsub.f32 %v983, %v1041
        %v1066 = vsub.f32 %v988, %v1043
        %v1067 = vsub.f32 %v993, %v1045
        %v1068 = vsub.f32 %v998, %v1047
        %v1069 = vsub.f32 %v1003, %v1049
        %v1070 = vsub.f32 %v1008, %v1051
        %v1071 = vsub.f32 %v1013, %v1053
        %v1072 = vsub.f32 %v1018, %v1055
        %v1073 = vsub.f32 %v1023, %v1057
        %v1074 = vmul.f32 %v1058, 1.442695
        %v1075 = vpow.pop %v1074
        %v1076 = vmul.f32 %v1059, 1.442695
        %v1077 = vpow.pop %v1076
        %v1078 = vmul.f32 %v1060, 1.442695
        %v1079 = vpow.pop %v1078
        %v1080 = vmul.f32 %v1061, 1.442695
        %v1081 = vpow.pop %v1080
        %v1082 = vmul.f32 %v1062, 1.442695
        %v1083 = vpow.pop %v1082
        %v1084 = vmul.f32 %v1063, 1.442695
        %v1085 = vpow.pop %v1084
        %v1086 = vmul.f32 %v1064, 1.442695
        %v1087 = vpow.pop %v1086
        %v1088 = vmul.f32 %v1065, 1.442695
        %v1089 = vpow.pop %v1088
        %v1090 = vmul.f32 %v1066, 1.442695
        %v1091 = vpow.pop %v1090
        %v1092 = vmul.f32 %v1067, 1.442695
        %v1093 = vpow.pop %v1092
        %v1094 = vmul.f32 %v1068, 1.442695
        %v1095 = vpow.pop %v1094
        %v1096 = vmul.f32 %v1069, 1.442695
        %v1097 = vpow.pop %v1096
        %v1098 = vmul.f32 %v1070, 1.442695
        %v1099 = vpow.pop %v1098
        %v1100 = vmul.f32 %v1071, 1.442695
        %v1101 = vpow.pop %v1100
        %v1102 = vmul.f32 %v1072, 1.442695
        %v1103 = vpow.pop %v1102
        %v1104 = vmul.f32 %v1073, 1.442695
        %v1105 = vpow.pop %v1104
        %1106 = vadd.xlane.f32.xlu0 %v1075
        %v1107 = vpop.xlane.xlu0 %1106
        %1108 = vadd.xlane.f32.xlu0 %v1077
        %v1109 = vpop.xlane.xlu0 %1108
        %1110 = vadd.xlane.f32.xlu0 %v1079
        %v1111 = vpop.xlane.xlu0 %1110
        %1112 = vadd.xlane.f32.xlu0 %v1081
        %v1113 = vpop.xlane.xlu0 %1112
        %1114 = vadd.xlane.f32.xlu0 %v1083
        %v1115 = vpop.xlane.xlu0 %1114
        %1116 = vadd.xlane.f32.xlu0 %v1085
        %v1117 = vpop.xlane.xlu0 %1116
        %1118 = vadd.xlane.f32.xlu0 %v1087
        %v1119 = vpop.xlane.xlu0 %1118
        %1120 = vadd.xlane.f32.xlu0 %v1089
        %v1121 = vpop.xlane.xlu0 %1120
        %1122 = vadd.xlane.f32.xlu0 %v1091
        %v1123 = vpop.xlane.xlu0 %1122
        %1124 = vadd.xlane.f32.xlu0 %v1093
        %v1125 = vpop.xlane.xlu0 %1124
        %1126 = vadd.xlane.f32.xlu0 %v1095
        %v1127 = vpop.xlane.xlu0 %1126
        %1128 = vadd.xlane.f32.xlu0 %v1097
        %v1129 = vpop.xlane.xlu0 %1128
        %1130 = vadd.xlane.f32.xlu0 %v1099
        %v1131 = vpop.xlane.xlu0 %1130
        %1132 = vadd.xlane.f32.xlu0 %v1101
        %v1133 = vpop.xlane.xlu0 %1132
        %1134 = vadd.xlane.f32.xlu0 %v1103
        %v1135 = vpop.xlane.xlu0 %1134
        %1136 = vadd.xlane.f32.xlu0 %v1105
        %v1137 = vpop.xlane.xlu0 %1136
        %v1138 = vrcp.pop %v1107
        %v1139 = vmul.f32 %v1075, %v1138
        %v1140 = vrcp.pop %v1109
        %v1141 = vmul.f32 %v1077, %v1140
        %v1142 = vrcp.pop %v1111
        %v1143 = vmul.f32 %v1079, %v1142
        %v1144 = vrcp.pop %v1113
        %v1145 = vmul.f32 %v1081, %v1144
        %v1146 = vrcp.pop %v1115
        %v1147 = vmul.f32 %v1083, %v1146
        %v1148 = vrcp.pop %v1117
        %v1149 = vmul.f32 %v1085, %v1148
        %v1150 = vrcp.pop %v1119
        %v1151 = vmul.f32 %v1087, %v1150
        %v1152 = vrcp.pop %v1121
        %v1153 = vmul.f32 %v1089, %v1152
        %v1154 = vrcp.pop %v1123
        %v1155 = vmul.f32 %v1091, %v1154
        %v1156 = vrcp.pop %v1125
        %v1157 = vmul.f32 %v1093, %v1156
        %v1158 = vrcp.pop %v1127
        %v1159 = vmul.f32 %v1095, %v1158
        %v1160 = vrcp.pop %v1129
        %v1161 = vmul.f32 %v1097, %v1160
        %v1162 = vrcp.pop %v1131
        %v1163 = vmul.f32 %v1099, %v1162
        %v1164 = vrcp.pop %v1133
        %v1165 = vmul.f32 %v1101, %v1164
        %v1166 = vrcp.pop %v1135
        %v1167 = vmul.f32 %v1103, %v1166
        %v1168 = vrcp.pop %v1137
        %v1169 = vmul.f32 %v1105, %v1168
        %1170 = vst [vmem:[%s287] sm:$0xff] %v1139
        %1171 = vst [vmem:[%s287 + $0x8] sm:$0xff] %v1141
        %1172 = vst [vmem:[%s287 + $0x10] sm:$0xff] %v1143
        %1173 = vst [vmem:[%s287 + $0x18] sm:$0xff] %v1145
        %1174 = vst [vmem:[%s287 + $0x20] sm:$0xff] %v1147
        %1175 = vst [vmem:[%s287 + $0x28] sm:$0xff] %v1149
        %1176 = vst [vmem:[%s287 + $0x30] sm:$0xff] %v1151
        %1177 = vst [vmem:[%s287 + $0x38] sm:$0xff] %v1153
        %1178 = vst [vmem:[%s287 + $0x40] sm:$0xff] %v1155
        %1179 = vst [vmem:[%s287 + $0x48] sm:$0xff] %v1157
        %1180 = vst [vmem:[%s287 + $0x50] sm:$0xff] %v1159
        %1181 = vst [vmem:[%s287 + $0x58] sm:$0xff] %v1161
        %1182 = vst [vmem:[%s287 + $0x60] sm:$0xff] %v1163
        %1183 = vst [vmem:[%s287 + $0x68] sm:$0xff] %v1165
        %1184 = vst [vmem:[%s287 + $0x70] sm:$0xff] %v1167
        %1185 = vst [vmem:[%s287 + $0x78] sm:$0xff] %v1169
        %s1186 = sand.u32 %s182, 1
        %s1187 = scalar_lea.sflag [#allocation4], %s1186
        %s1188 = sand.u32 %s182, 1
        %s1189 = smul.addr %s1188, 128
        %s1190 = scalar_lea.vmem [#allocation5], %s1189
        // Predicated region
        $region53: #{tpu_custom_call.1} parent=47 // pred_check
          %p1191 = pneg %p192
        $region54: #{tpu_custom_call.1} parent=47 // pred_check_branch
          %1193 = sbr.rel (%p1191) target = $region56
        $region55: #{tpu_custom_call.1} parent=47 // pred_region
          %s1194 = smul.u32 16, %s22
          %s1196 = ssub.s32 2048, 2048
          %1197 = vsyncadd %s1187, %s1196
          %s1198 = smul.addr %s1194, 128
          %s1199 = scalar_lea.hbm %s7, %s1198
          %s1200 = sshll.u32 %s1190, 4
          %s1201 = int_to_ptr.vmem [resolvable:$true] %s1200
          %1206 = dma.vmem_to_hbm [thread:$0]  %s1201, 2048, %s1199, %s1187, 128, 128, 8
        $region56: #{tpu_custom_call.1} parent=47 // pred_fallthru
          _
      $region48: #{tpu_custom_call.1} parent=5 // pred_fallthru
        _
      %p1207 = scmp.le.s32.totalorder 2, %s17
      // Predicated region
      $region57: #{tpu_custom_call.1} parent=5 // pred_check
        %p1208 = pneg %p1207
      $region58: #{tpu_custom_call.1} parent=5 // pred_check_branch
        %1210 = sbr.rel (%p1208) target = $region60
      $region59: #{tpu_custom_call.1} parent=5 // pred_region
        %s1211 = ssub.s32 %s17, 2
        // Predicated region
        $region61: #{tpu_custom_call.1} parent=59 // pred_check
          %p1212 = pneg %p198
        $region62: #{tpu_custom_call.1} parent=59 // pred_check_branch
          %1214 = sbr.rel (%p1212) target = $region64
        $region63: #{tpu_custom_call.1} parent=59 // pred_region
          %s1215 = sand.u32 %s183, 1
          %s1216 = scalar_lea.sflag [#allocation4], %s1215
          %s1217 = sand.u32 %s183, 1
          %s1218 = smul.addr %s1217, 128
          %s1219 = scalar_lea.vmem [#allocation5], %s1218
          %1220 = dma.done %s1216, 2048
        $region64: #{tpu_custom_call.1} parent=59 // pred_fallthru
          _
      $region60: #{tpu_custom_call.1} parent=5 // pred_fallthru
        _
    $region6: #{tpu_custom_call.1} parent=1 // loop_footer
      %s21 = sadd.s32 1, %s17
    $region7: #{tpu_custom_call.1} parent=1 // loop_footer_branch
      %16 = sbr.rel target = $region3
    $region8: #{tpu_custom_call.1} parent=1 // loop_exit
      _
    %1221 = vsyncpa [#allocation3], 1
    %s1222 = scalar_lea.sflag [#allocation3], 1
    %1223 = vsyncpa %s1222, 1
    %1224 = vsyncpa [#allocation4], 1
    %s1225 = scalar_lea.sflag [#allocation4], 1
    %1226 = vsyncpa %s1225, 1

</llo_original>
